<compile_context>
chip_gen: v5e
topology: v5e:2x2
jax: 0.10.0
libtpu: 0.0.40
codegen_flags: <defaults>
</compile_context>

<pallas_src>
import numpy as np
import jax
import jax.numpy as jnp
from jax.experimental import pallas as pl
from jax.experimental.pallas import tpu as pltpu


def _trelu_kernel(x_ref, t_ref, o_ref, m_ref):
    # x_ref/o_ref: (TB, K*F)   t_ref: (K, F) float32   m_ref: (TB, F)
    K, F = t_ref.shape

    # K-reduction over static 128-aligned lane chunks -> fully dense vregs.
    # f32 accumulation is intentional (documented): more accurate than a strict
    # low-precision sum; mask may differ from PyTorch only for exactly-borderline sums.
    acc = x_ref[:, 0:F].astype(jnp.float32) * t_ref[0:1, :]
    for k in range(1, K):
        acc = acc + x_ref[:, k * F:(k + 1) * F].astype(jnp.float32) * t_ref[k:k + 1, :]

    mask = (acc >= 0.0).astype(x_ref.dtype)          # (TB, F) of {0, 1}
    m_ref[...] = mask

    # Broadcast the mask back over the K chunks with dense, lane-aligned stores.
    for k in range(K):
        o_ref[:, k * F:(k + 1) * F] = x_ref[:, k * F:(k + 1) * F] * mask


def _round_up(x, m):
    return ((x + m - 1) // m) * m


def _pick_tb(B, K, F, itemsize):
    """Pick the batch tile + an explicit VMEM limit from the chip's VMEM capacity."""
    try:
        vmem_cap = int(getattr(pltpu.get_tpu_info(), "vmem_capacity_bytes", 64 << 20))
    except Exception:  # pragma: no cover - conservative fallback off-TPU
        vmem_cap = 64 << 20

    # Per batch row, double-buffered: x block + o block (K*F each) and mask row (F).
    per_row = (2 * K * F + F) * itemsize * 2
    budget = min(vmem_cap // 3, 24 << 20)            # leave headroom for scratch/t
    tb = max(8, (budget // per_row) // 8 * 8)
    tb = min(tb, 512)
    if B >= 16:
        # Guarantee >= 2 grid steps so both v7x TensorCores are used
        # (costs at most one extra ~0.35us grid step on 1-TC v5e/v6e).
        tb = min(tb, _round_up((B + 1) // 2, 8))
    if tb >= B:
        tb = B

    needed = per_row * tb + 2 * K * F * 4 + (4 << 20)
    vmem_limit = int(min(max(needed, 32 << 20), max(vmem_cap - (8 << 20), 32 << 20)))
    # TODO(synk): for extreme K*F where even tb=8 exceeds VMEM, a feature-tiled
    # (two-level) variant would be needed; not required for this model's shapes.
    return tb, vmem_limit


def trelu_forward(x, t, *, tb=None):
    """x: (B, K, F), t: (K, F) -> (output (B, K, F), mask (B, F))."""
    B, K, F = x.shape
    assert t.shape == (K, F)
    itemsize = jnp.dtype(x.dtype).itemsize

    auto_tb, vmem_limit = _pick_tb(B, K, F, itemsize)
    if tb is None:
        tb = auto_tb
    if tb >= B:
        tb = B
    else:
        tb = min(_round_up(tb, 8), B) if _round_up(tb, 8) < B else B

    # Free contiguous view: (B, K, F) -> (B, K*F).  No extra HBM traffic.
    x2 = x.reshape(B, K * F)
    t32 = t.astype(jnp.float32)                      # tiny ±1 pattern, kept resident

    grid = (pl.cdiv(B, tb),)

    cost = pl.CostEstimate(
        flops=3 * B * K * F + B * F,                 # K-reduce mul+add, cmp, mask mul
        transcendentals=0,
        bytes_accessed=(2 * B * K * F * itemsize     # read x + write output
                        + B * F * itemsize           # write mask
                        + K * F * 4),                # read t
    )

    out2, mask = pl.pallas_call(
        _trelu_kernel,
        out_shape=(
            jax.ShapeDtypeStruct((B, K * F), x.dtype),
            jax.ShapeDtypeStruct((B, F), x.dtype),
        ),
        grid_spec=pl.GridSpec(
            grid=grid,
            in_specs=[
                pl.BlockSpec((tb, K * F), lambda i: (i, 0)),
                pl.BlockSpec((K, F), lambda i: (0, 0)),   # t resident, fetched once
            ],
            out_specs=(
                pl.BlockSpec((tb, K * F), lambda i: (i, 0)),
                pl.BlockSpec((tb, F), lambda i: (i, 0)),
            ),
        ),
        compiler_params=pltpu.CompilerParams(
            dimension_semantics=("parallel",),
            vmem_limit_bytes=vmem_limit,
        ),
        cost_estimate=cost,
    )(x2, t32)

    return out2.reshape(B, K, F), mask


def init_trelu_t(key, category_dim, num_features):
    """Deterministic replica of the module's __init__ for t.

    t[:, ::2] = t_half, t[:, 1::2] = -t_half with t_half in {-1, +1}.
    """
    assert num_features % 2 == 0
    t_half = (
        jax.random.randint(key, (category_dim, num_features // 2), 0, 2)
        .astype(jnp.float32) * 2.0 - 1.0
    )
    t = jnp.stack([t_half, -t_half], axis=-1).reshape(category_dim, num_features)
    return t


if __name__ == "__main__":
    # Small shapes consistent with the module's forward; F is a multiple of 128
    # so every in-kernel lane slice and store is tile-aligned (unmasked vst's).
    batch = 4
    category_dim = 4
    num_features = 256

    key = jax.random.PRNGKey(0)
    k_x, k_t = jax.random.split(key)

    x = jax.random.normal(k_x, (batch, category_dim, num_features), dtype=jnp.float32)
    t = init_trelu_t(k_t, category_dim, num_features)

    out, mask = trelu_forward(x, t)
    out = jax.block_until_ready(out)
    mask = jax.block_until_ready(mask)

    # Reference check (plain JAX), same semantics as the PyTorch forward.
    to_thresh_ref = jnp.sum(x * t[None], axis=1)
    mask_ref = (to_thresh_ref >= 0).astype(x.dtype)
    ref = x * mask_ref[:, None, :]

    np.testing.assert_allclose(np.asarray(mask), np.asarray(mask_ref), rtol=0, atol=0)
    np.testing.assert_allclose(np.asarray(out), np.asarray(ref), rtol=1e-6, atol=1e-6)

    # TODO(synk): custom_backward (grad_output * mask) is not part of the forward
    # pass; the mask output above provides exactly what it needs.

    print("KERNEL_OK")
</pallas_src>

<mosaic_0001>
module attributes {stable_mosaic.version = 11 : i64} {
  func.func @_trelu_kernel(%arg0: i32, %arg1: memref<4x1024xf32, #tpu.memory_space<vmem>>, %arg2: memref<4x256xf32, #tpu.memory_space<vmem>>, %arg3: memref<4x1024xf32, #tpu.memory_space<vmem>>, %arg4: memref<4x256xf32, #tpu.memory_space<vmem>>) attributes {dimension_semantics = [#tpu.dimension_semantics<parallel>], iteration_bounds = array<i64: 1>, scalar_prefetch = 0 : i64, scratch_operands = 0 : i64, tpu.core_type = #tpu.core_type<tc>, window_params = [{transform_indices = @transform_0, window_bounds = array<i64: 4, 1024>}, {pipeline_mode = #tpu.pipeline_mode<synchronous>, transform_indices = @transform_1, window_bounds = array<i64: 4, 256>}, {transform_indices = @transform_2, window_bounds = array<i64: 4, 1024>}, {transform_indices = @transform_3, window_bounds = array<i64: 4, 256>}]} {
    %c0 = arith.constant 0 : index
    %c0_0 = arith.constant 0 : index
    %0 = vector.load %arg1[%c0, %c0_0] : memref<4x1024xf32, #tpu.memory_space<vmem>>, vector<4x256xf32>
    %c0_1 = arith.constant 0 : index
    %c0_2 = arith.constant 0 : index
    %1 = vector.load %arg2[%c0_1, %c0_2] : memref<4x256xf32, #tpu.memory_space<vmem>>, vector<1x256xf32>
    %2 = vector.broadcast %1 : vector<1x256xf32> to vector<4x256xf32>
    %3 = arith.mulf %0, %2 : vector<4x256xf32>
    %c0_3 = arith.constant 0 : index
    %c256 = arith.constant 256 : index
    %4 = vector.load %arg1[%c0_3, %c256] : memref<4x1024xf32, #tpu.memory_space<vmem>>, vector<4x256xf32>
    %c1 = arith.constant 1 : index
    %c0_4 = arith.constant 0 : index
    %5 = vector.load %arg2[%c1, %c0_4] : memref<4x256xf32, #tpu.memory_space<vmem>>, vector<1x256xf32>
    %6 = vector.broadcast %5 : vector<1x256xf32> to vector<4x256xf32>
    %7 = arith.mulf %4, %6 : vector<4x256xf32>
    %8 = arith.addf %3, %7 : vector<4x256xf32>
    %c0_5 = arith.constant 0 : index
    %c512 = arith.constant 512 : index
    %9 = vector.load %arg1[%c0_5, %c512] : memref<4x1024xf32, #tpu.memory_space<vmem>>, vector<4x256xf32>
    %c2 = arith.constant 2 : index
    %c0_6 = arith.constant 0 : index
    %10 = vector.load %arg2[%c2, %c0_6] : memref<4x256xf32, #tpu.memory_space<vmem>>, vector<1x256xf32>
    %11 = vector.broadcast %10 : vector<1x256xf32> to vector<4x256xf32>
    %12 = arith.mulf %9, %11 : vector<4x256xf32>
    %13 = arith.addf %8, %12 : vector<4x256xf32>
    %c0_7 = arith.constant 0 : index
    %c768 = arith.constant 768 : index
    %14 = vector.load %arg1[%c0_7, %c768] : memref<4x1024xf32, #tpu.memory_space<vmem>>, vector<4x256xf32>
    %c3 = arith.constant 3 : index
    %c0_8 = arith.constant 0 : index
    %15 = vector.load %arg2[%c3, %c0_8] : memref<4x256xf32, #tpu.memory_space<vmem>>, vector<1x256xf32>
    %16 = vector.broadcast %15 : vector<1x256xf32> to vector<4x256xf32>
    %17 = arith.mulf %14, %16 : vector<4x256xf32>
    %18 = arith.addf %13, %17 : vector<4x256xf32>
    %cst = arith.constant 0.000000e+00 : f32
    %19 = vector.broadcast %cst : f32 to vector<4x256xf32>
    %20 = arith.cmpf oge, %18, %19 : vector<4x256xf32>
    %21 = arith.extui %20 : vector<4x256xi1> to vector<4x256xi32>
    %22 = arith.sitofp %21 : vector<4x256xi32> to vector<4x256xf32>
    %c0_9 = arith.constant 0 : index
    %c0_10 = arith.constant 0 : index
    %23 = vector.load %arg4[%c0_9, %c0_10] : memref<4x256xf32, #tpu.memory_space<vmem>>, vector<4x256xf32>
    tpu.vector_store %arg4[%c0_9, %c0_10], %22 {strides = array<i32>} : memref<4x256xf32, #tpu.memory_space<vmem>>, vector<4x256xf32>,
    %c0_11 = arith.constant 0 : index
    %c0_12 = arith.constant 0 : index
    %24 = vector.load %arg1[%c0_11, %c0_12] : memref<4x1024xf32, #tpu.memory_space<vmem>>, vector<4x256xf32>
    %25 = arith.mulf %24, %22 : vector<4x256xf32>
    %c0_13 = arith.constant 0 : index
    %c0_14 = arith.constant 0 : index
    %26 = vector.load %arg3[%c0_13, %c0_14] : memref<4x1024xf32, #tpu.memory_space<vmem>>, vector<4x256xf32>
    tpu.vector_store %arg3[%c0_13, %c0_14], %25 {strides = array<i32>} : memref<4x1024xf32, #tpu.memory_space<vmem>>, vector<4x256xf32>,
    %c0_15 = arith.constant 0 : index
    %c256_16 = arith.constant 256 : index
    %27 = vector.load %arg1[%c0_15, %c256_16] : memref<4x1024xf32, #tpu.memory_space<vmem>>, vector<4x256xf32>
    %28 = arith.mulf %27, %22 : vector<4x256xf32>
    %c0_17 = arith.constant 0 : index
    %c256_18 = arith.constant 256 : index
    %29 = vector.load %arg3[%c0_17, %c256_18] : memref<4x1024xf32, #tpu.memory_space<vmem>>, vector<4x256xf32>
    tpu.vector_store %arg3[%c0_17, %c256_18], %28 {strides = array<i32>} : memref<4x1024xf32, #tpu.memory_space<vmem>>, vector<4x256xf32>,
    %c0_19 = arith.constant 0 : index
    %c512_20 = arith.constant 512 : index
    %30 = vector.load %arg1[%c0_19, %c512_20] : memref<4x1024xf32, #tpu.memory_space<vmem>>, vector<4x256xf32>
    %31 = arith.mulf %30, %22 : vector<4x256xf32>
    %c0_21 = arith.constant 0 : index
    %c512_22 = arith.constant 512 : index
    %32 = vector.load %arg3[%c0_21, %c512_22] : memref<4x1024xf32, #tpu.memory_space<vmem>>, vector<4x256xf32>
    tpu.vector_store %arg3[%c0_21, %c512_22], %31 {strides = array<i32>} : memref<4x1024xf32, #tpu.memory_space<vmem>>, vector<4x256xf32>,
    %c0_23 = arith.constant 0 : index
    %c768_24 = arith.constant 768 : index
    %33 = vector.load %arg1[%c0_23, %c768_24] : memref<4x1024xf32, #tpu.memory_space<vmem>>, vector<4x256xf32>
    %34 = arith.mulf %33, %22 : vector<4x256xf32>
    %c0_25 = arith.constant 0 : index
    %c768_26 = arith.constant 768 : index
    %35 = vector.load %arg3[%c0_25, %c768_26] : memref<4x1024xf32, #tpu.memory_space<vmem>>, vector<4x256xf32>
    tpu.vector_store %arg3[%c0_25, %c768_26], %34 {strides = array<i32>} : memref<4x1024xf32, #tpu.memory_space<vmem>>, vector<4x256xf32>,
    return
  }
  func.func @transform_0(%arg0: i32) -> (i32, i32) {
    %c0_i32 = arith.constant 0 : i32
    %c0_i32_0 = arith.constant 0 : i32
    return %arg0, %c0_i32 : i32, i32
  }
  func.func @transform_1(%arg0: i32) -> (i32, i32) {
    %c0_i32 = arith.constant 0 : i32
    %c0_i32_0 = arith.constant 0 : i32
    %c0_i32_1 = arith.constant 0 : i32
    return %c0_i32, %c0_i32_0 : i32, i32
  }
  func.func @transform_2(%arg0: i32) -> (i32, i32) {
    %c0_i32 = arith.constant 0 : i32
    %c0_i32_0 = arith.constant 0 : i32
    return %arg0, %c0_i32 : i32, i32
  }
  func.func @transform_3(%arg0: i32) -> (i32, i32) {
    %c0_i32 = arith.constant 0 : i32
    %c0_i32_0 = arith.constant 0 : i32
    return %arg0, %c0_i32 : i32, i32
  }
}

</mosaic_0001>

<llo_original>
// kernel: tpu_custom_call.1
$region0: #{tpu_custom_call.1}
  #allocation0 [shape = 'u32[]', space=smem, size = 0x4, offset = 0x4, fixed_abs, tag = 'smem constant byte address 0x4 - core index']
  #allocation1 [shape = 'u32[72,128]{1,0:T(1,128)}', space=vmem, size = 0x9000, scoped, tag = 'internal scratch']
  %s0 = inlined_call_operand.hbm [shape: f32[4,1024], index: 0, kind: input, shape index: {}]
  %s1 = inlined_call_operand.hbm [shape: f32[4,256], index: 1, kind: input, shape index: {}]
  %s2 = inlined_call_operand.hbm [shape: f32[4,1024], index: 2, kind: output, shape index: {0}]
  %s3 = inlined_call_operand.hbm [shape: f32[4,256], index: 3, kind: output, shape index: {1}]
  %4 = xla_tuple %s2, %s3
  %s5 = sld [smem:[#allocation0]]
  $region34: #{tpu_custom_call.1} parent=0
    _
  %s7 = ssub.s32 1, %s5
  %s8 = scalar_select 0, %s7, %s5
  $region1: #{tpu_custom_call.1} parent=0
    #allocation2 [shape = 'u8[16384]{0}', space=vmem, size = 0x4000, scoped, tag = 'input window, operand 0, single buffered']
    #allocation3 [shape = 's32[1]{0}', space=sflag, size = 0x4, scoped, tag = 'scoped memory for tpu_custom_call.1']
    #allocation4 [shape = 's32[1]{0}', space=sflag, size = 0x4, scoped, tag = 'scoped memory for tpu_custom_call.1']
    #allocation5 [shape = 'u8[4096]{0}', space=vmem, size = 0x1000, scoped, tag = 'input window, operand 1, single buffered']
    #allocation6 [shape = 's32[1]{0}', space=sflag, size = 0x4, scoped, tag = 'scoped memory for tpu_custom_call.1']
    #allocation7 [shape = 'u8[16384]{0}', space=vmem, size = 0x4000, scoped, tag = 'output window, operand 0, single buffered']
    #allocation8 [shape = 'u8[4096]{0}', space=vmem, size = 0x1000, scoped, tag = 'output window, operand 1, single buffered']
    #allocation9 [shape = 's32[1]{0}', space=sflag, size = 0x4, scoped, tag = 'scoped memory for tpu_custom_call.1']
    %9 = vsyncpa [#allocation3], 0
    %10 = vsyncpa [#allocation6], 0
    %11 = vsyncpa [#allocation4], 0
    %12 = vsyncpa [#allocation9], 0
    // Predicated region
    $region2: #{tpu_custom_call.1} parent=1 // pred_check
      _
    $region3: #{tpu_custom_call.1} parent=1 // pred_check_branch
      %14 = sbr.rel (0) target = $region5
    $region4: #{tpu_custom_call.1} parent=1 // pred_region
      %16 = vsyncadd [#allocation3], 0
      %s18 = sshll.u32 %s0, 4
      %s19 = int_to_ptr.hbm [resolvable:$true] %s18
      %s20 = sshll.u32 [#allocation2], 4
      %s21 = int_to_ptr.vmem [resolvable:$true] %s20
      %23 = dma.hbm_to_vmem [thread:$0]  %s19, 512, %s21, [#allocation3]
    $region5: #{tpu_custom_call.1} parent=1 // pred_fallthru
      _
    // Predicated region
    $region6: #{tpu_custom_call.1} parent=1 // pred_check
      _
    $region7: #{tpu_custom_call.1} parent=1 // pred_check_branch
      %25 = sbr.rel (0) target = $region9
    $region8: #{tpu_custom_call.1} parent=1 // pred_region
      %27 = vsyncadd [#allocation6], 0
      %s29 = sshll.u32 %s1, 4
      %s30 = int_to_ptr.hbm [resolvable:$true] %s29
      %s31 = sshll.u32 [#allocation5], 4
      %s32 = int_to_ptr.vmem [resolvable:$true] %s31
      %34 = dma.hbm_to_vmem [thread:$0]  %s30, 128, %s32, [#allocation6]
    $region9: #{tpu_custom_call.1} parent=1 // pred_fallthru
      _
    // Predicated region
    $region10: #{tpu_custom_call.1} parent=1 // pred_check
      _
    $region11: #{tpu_custom_call.1} parent=1 // pred_check_branch
      %36 = sbr.rel (0) target = $region13
    $region12: #{tpu_custom_call.1} parent=1 // pred_region
      %38 = dma.done [#allocation3], 512
    $region13: #{tpu_custom_call.1} parent=1 // pred_fallthru
      _
    // Predicated region
    $region14: #{tpu_custom_call.1} parent=1 // pred_check
      _
    $region15: #{tpu_custom_call.1} parent=1 // pred_check_branch
      %40 = sbr.rel (0) target = $region17
    $region16: #{tpu_custom_call.1} parent=1 // pred_region
      %42 = dma.done [#allocation6], 128
    $region17: #{tpu_custom_call.1} parent=1 // pred_fallthru
      _
    %v43 = vld [vmem:[#allocation2] sm:$0xff]
    %v44 = vld [vmem:[#allocation5] ss:$4 sm:$0x3]
    %v46 = vperm.slane %v44, 0
    %v47 = vperm.slane %v44, 1
    %v48 = vrot.slane %v47, 4
    %vm49 = vcmask 1043456
    %v50 = vsel %vm49, %v46, %v48
    %v52 = vmul.f32 %v43, %v50
    %v53 = vld [vmem:[#allocation2 + $0x8] sm:$0xff]
    %s54 = scalar_lea.vmem [#allocation5], 1
    %v55 = vld [vmem:[%s54] ss:$4 sm:$0x3]
    %v57 = vperm.slane %v55, 0
    %v58 = vperm.slane %v55, 1
    %v59 = vrot.slane %v58, 4
    %v60 = vsel %vm49, %v57, %v59
    %v62 = vmul.f32 %v53, %v60
    %v63 = vadd.f32 %v52, %v62
    %v64 = vld [vmem:[#allocation2 + $0x10] sm:$0xff]
    %s65 = scalar_lea.vmem [#allocation5], 2
    %v66 = vld [vmem:[%s65] ss:$4 sm:$0x3]
    %v68 = vperm.slane %v66, 0
    %v69 = vperm.slane %v66, 1
    %v70 = vrot.slane %v69, 4
    %v71 = vsel %vm49, %v68, %v70
    %v73 = vmul.f32 %v64, %v71
    %v74 = vadd.f32 %v63, %v73
    %v75 = vld [vmem:[#allocation2 + $0x18] sm:$0xff]
    %s76 = scalar_lea.vmem [#allocation5], 3
    %v77 = vld [vmem:[%s76] ss:$4 sm:$0x3]
    %v79 = vperm.slane %v77, 0
    %v80 = vperm.slane %v77, 1
    %v81 = vrot.slane %v80, 4
    %v82 = vsel %vm49, %v79, %v81
    %v84 = vmul.f32 %v75, %v82
    %v85 = vadd.f32 %v74, %v84
    %vm86 = vcmp.ge.f32.partialorder %v85, 0.0
    %v87 = vsel %vm86, 1, 0
    %v88 = vcvt.s32.f32 %v87
    %89 = vst [vmem:[#allocation8] sm:$0xff] %v88
    %v90 = vld [vmem:[#allocation2] sm:$0xff]
    %v91 = vmul.f32 %v90, %v88
    %92 = vst [vmem:[#allocation7] sm:$0xff] %v91
    %v93 = vld [vmem:[#allocation2 + $0x8] sm:$0xff]
    %v94 = vmul.f32 %v93, %v88
    %95 = vst [vmem:[#allocation7 + $0x8] sm:$0xff] %v94
    %v96 = vld [vmem:[#allocation2 + $0x10] sm:$0xff]
    %v97 = vmul.f32 %v96, %v88
    %98 = vst [vmem:[#allocation7 + $0x10] sm:$0xff] %v97
    %v99 = vld [vmem:[#allocation2 + $0x18] sm:$0xff]
    %v100 = vmul.f32 %v99, %v88
    %101 = vst [vmem:[#allocation7 + $0x18] sm:$0xff] %v100
    // Predicated region
    $region18: #{tpu_custom_call.1} parent=1 // pred_check
      _
    $region19: #{tpu_custom_call.1} parent=1 // pred_check_branch
      %103 = sbr.rel (0) target = $region21
    $region20: #{tpu_custom_call.1} parent=1 // pred_region
      %105 = vsyncadd [#allocation4], 0
      %s107 = sshll.u32 [#allocation7], 4
      %s108 = int_to_ptr.vmem [resolvable:$true] %s107
      %s109 = sshll.u32 %s2, 4
      %s110 = int_to_ptr.hbm [resolvable:$true] %s109
      %112 = dma.vmem_to_hbm [thread:$0]  %s108, 512, %s110, [#allocation4]
    $region21: #{tpu_custom_call.1} parent=1 // pred_fallthru
      _
    // Predicated region
    $region22: #{tpu_custom_call.1} parent=1 // pred_check
      _
    $region23: #{tpu_custom_call.1} parent=1 // pred_check_branch
      %114 = sbr.rel (0) target = $region25
    $region24: #{tpu_custom_call.1} parent=1 // pred_region
      %116 = vsyncadd [#allocation9], 0
      %s118 = sshll.u32 [#allocation8], 4
      %s119 = int_to_ptr.vmem [resolvable:$true] %s118
      %s120 = sshll.u32 %s3, 4
      %s121 = int_to_ptr.hbm [resolvable:$true] %s120
      %123 = dma.vmem_to_hbm [thread:$0]  %s119, 128, %s121, [#allocation9]
    $region25: #{tpu_custom_call.1} parent=1 // pred_fallthru
      _
    // Predicated region
    $region26: #{tpu_custom_call.1} parent=1 // pred_check
      _
    $region27: #{tpu_custom_call.1} parent=1 // pred_check_branch
      %125 = sbr.rel (0) target = $region29
    $region28: #{tpu_custom_call.1} parent=1 // pred_region
      %127 = dma.done [#allocation4], 512
    $region29: #{tpu_custom_call.1} parent=1 // pred_fallthru
      _
    // Predicated region
    $region30: #{tpu_custom_call.1} parent=1 // pred_check
      _
    $region31: #{tpu_custom_call.1} parent=1 // pred_check_branch
      %129 = sbr.rel (0) target = $region33
    $region32: #{tpu_custom_call.1} parent=1 // pred_region
      %131 = dma.done [#allocation9], 128
    $region33: #{tpu_custom_call.1} parent=1 // pred_fallthru
      _
    %132 = vsyncpa [#allocation3], 1
    %133 = vsyncpa [#allocation6], 1
    %134 = vsyncpa [#allocation4], 1
    %135 = vsyncpa [#allocation9], 1

</llo_original>
